<compile_context>
chip_gen: v7x
topology: tpu7x:2x2x1
jax: 0.10.0
libtpu: 0.0.40
codegen_flags: <defaults>
</compile_context>

<pallas_src>
import functools

import jax
import jax.numpy as jnp
from jax import lax
from jax.experimental import pallas as pl
from jax.experimental.pallas import tpu as pltpu


def _smooth_ap_kernel(x_ref, cols_ref, out_ref, p_scr, acc_scr, *,
                      anneal, group, classes_per_block, batch_total):
    """Grid step = (class block b, column chunk j).

    x_ref    : (CB*g, D)  query rows of the CB classes handled by block b.
    cols_ref : (TB, D)    column chunk j of the full batch (retrieval set).
    out_ref  : (1, 1)     partial sum_{a,c} pos_rk / all_rk for this class block.
    p_scr    : (CB*g, g)  scaled class-own sims p[cb*g+a, c] = <x_a, x_c>/(2*anneal).
    acc_scr  : (CB*g, g)  running sum over all columns k of tanh terms.
    """
    g = group
    cb = classes_per_block
    j = pl.program_id(1)
    n_chunks = pl.num_programs(1)

    half_inv_t = jnp.float32(0.5 / anneal)         # sigma(z) = 0.5 + 0.5*tanh(z * half_inv_t)
    dn = (((1,), (1,)), ((), ()))                  # contract the feature dim of both operands

    x = x_ref[...]                                 # (CB*g, D)

    # ---- once per class block: class-own similarities + zero the accumulator ----
    @pl.when(j == 0)
    def _init():
        gram = lax.dot_general(x, x, dn,
                               preferred_element_type=jnp.float32) * half_inv_t
        for c_blk in range(cb):                    # extract per-class diagonal (g, g) blocks
            r0 = c_blk * g
            p_scr[r0:r0 + g, :] = gram[r0:r0 + g, r0:r0 + g]
        acc_scr[...] = jnp.zeros_like(acc_scr)

    # ---- accumulate ranking sums over this column chunk ----
    s = lax.dot_general(x, cols_ref[...], dn,
                        preferred_element_type=jnp.float32) * half_inv_t   # (CB*g, TB)
    p = p_scr[...]                                                         # (CB*g, g), scaled

    col_sums = []
    for c in range(g):                             # g is small; fully 2-D, lane/sublane dense
        t = jnp.tanh(s - p[:, c:c + 1])                                    # (CB*g, TB)
        col_sums.append(jnp.sum(t, axis=-1, keepdims=True))               # (CB*g, 1)
    acc_scr[...] += jnp.concatenate(col_sums, axis=-1)                     # (CB*g, g)

    # ---- after the last column chunk: finalize ranks and write the partial ----
    @pl.when(j == n_chunks - 1)
    def _finalize():
        acc = acc_scr[...]
        pos_cols = []
        for c in range(g):
            tp = jnp.tanh(p - p[:, c:c + 1])                               # (CB*g, g)
            pos_cols.append(jnp.sum(tp, axis=-1, keepdims=True))
        pos_t = jnp.concatenate(pos_cols, axis=-1)                         # (CB*g, g)
        # sum_k sigma = 0.5*K + 0.5*sum_k tanh ; "+1 with diag masked" == "+0.5 unmasked"
        all_rk = 0.5 * jnp.float32(batch_total + 1) + 0.5 * acc
        pos_rk = 0.5 * jnp.float32(g + 1) + 0.5 * pos_t
        out_ref[...] = jnp.sum(pos_rk / all_rk, keepdims=True)             # (1, 1)


def _pick_class_block(num_id, group, target_rows=128):
    """Largest divisor CB of num_id with CB*group a multiple of 8 and <= target."""
    best = None
    for cand in range(1, num_id + 1):
        if num_id % cand:
            continue
        rows = cand * group
        if rows % 8 == 0 and rows <= target_rows:
            best = cand
    return best if best is not None else num_id    # full block (== B rows) is always legal


def _pick_col_chunk(batch, target=512):
    """Largest multiple-of-8 divisor of batch that is <= target (else full batch)."""
    if batch <= target:
        return batch
    best = None
    for cand in range(8, target + 1, 8):
        if batch % cand == 0:
            best = cand
    return best if best is not None else batch


def smooth_ap_loss(preds, *, anneal, num_id, block_classes=None, chunk_cols=None):
    """Pallas SmoothAP forward. preds: (batch_size, feat_dims) float32."""
    B, D = preds.shape
    assert B % num_id == 0
    g = B // num_id
    preds = preds.astype(jnp.float32)

    cb = block_classes if block_classes is not None else _pick_class_block(num_id, g)
    assert num_id % cb == 0
    tb = chunk_cols if chunk_cols is not None else _pick_col_chunk(B)
    assert B % tb == 0

    cbg = cb * g
    num_blocks = num_id // cb
    n_chunks = B // tb

    kernel = functools.partial(_smooth_ap_kernel, anneal=float(anneal), group=g,
                               classes_per_block=cb, batch_total=B)

    # Rough VMEM budget: double-buffered input tiles + matmul/slab intermediates.
    vmem_est = 4 * (2 * cbg * D + 2 * tb * D + 6 * cbg * tb + cbg * cbg + 4 * cbg * g)
    vmem_limit = int(min(max(2 * vmem_est, 32 * 1024 * 1024), 48 * 1024 * 1024))

    cost = pl.CostEstimate(
        flops=int(2 * D * B * (B + cbg)),
        transcendentals=int(B * g * (B + g)),
        bytes_accessed=int(4 * B * D * (num_blocks + 1) + 4 * num_blocks),
    )

    partials = pl.pallas_call(
        kernel,
        out_shape=jax.ShapeDtypeStruct((num_blocks, 1), jnp.float32),
        grid_spec=pltpu.PrefetchScalarGridSpec(
            num_scalar_prefetch=0,
            grid=(num_blocks, n_chunks),
            in_specs=[
                pl.BlockSpec((cbg, D), lambda b, j: (b, 0)),   # query rows of this class block
                pl.BlockSpec((tb, D), lambda b, j: (j, 0)),    # streamed retrieval columns
            ],
            out_specs=pl.BlockSpec((1, 1), lambda b, j: (b, 0)),
            scratch_shapes=[
                pltpu.VMEM((cbg, g), jnp.float32),             # p_scr
                pltpu.VMEM((cbg, g), jnp.float32),             # acc_scr
            ],
        ),
        compiler_params=pltpu.CompilerParams(
            dimension_semantics=("parallel", "arbitrary"),
            vmem_limit_bytes=vmem_limit,
        ),
        cost_estimate=cost,
    )(preds, preds)

    ap = jnp.sum(partials) / float(g * B)
    return jnp.reshape(1.0 - ap, (1,))   # matches the torch.zeros(1)-shaped return


def smooth_ap_reference(preds, anneal, num_id):
    """Pure-JAX transcription of the PyTorch forward, for verification."""
    B, D = preds.shape
    g = B // num_id

    def sigm(x):
        return 1.0 / (1.0 + jnp.exp(jnp.clip(-x / anneal, -50.0, 50.0)))

    mask = 1.0 - jnp.eye(B)
    sim_all = preds @ preds.T
    sim_diff = sim_all[:, None, :] - sim_all[:, :, None]
    sim_sg = sigm(sim_diff) * mask[None]
    sim_all_rk = jnp.sum(sim_sg, axis=-1) + 1.0

    xs = preds.reshape(num_id, g, D)
    pos_mask = 1.0 - jnp.eye(g)
    sim_pos = jnp.einsum('nid,njd->nij', xs, xs)
    sim_pos_diff = sim_pos[:, :, None, :] - sim_pos[:, :, :, None]
    sim_pos_sg = sigm(sim_pos_diff) * pos_mask[None, None]
    sim_pos_rk = jnp.sum(sim_pos_sg, axis=-1) + 1.0

    ap = 0.0
    for ind in range(num_id):
        blk = sim_all_rk[ind * g:(ind + 1) * g, ind * g:(ind + 1) * g]
        pos_divide = jnp.sum(sim_pos_rk[ind] / blk)
        ap = ap + pos_divide / g / B
    return jnp.reshape(1.0 - ap, (1,))


if __name__ == "__main__":
    key = jax.random.PRNGKey(0)
    k1, k2 = jax.random.split(key)

    # Case 1: small shapes consistent with the module (classes ordered, equal group size).
    anneal, batch_size, num_id, feat_dims = 0.01, 8, 2, 32
    preds = jax.random.normal(k1, (batch_size, feat_dims), dtype=jnp.float32)
    loss = jax.block_until_ready(smooth_ap_loss(preds, anneal=anneal, num_id=num_id))
    ref = smooth_ap_reference(preds, anneal, num_id)
    assert jnp.allclose(loss, ref, rtol=1e-5, atol=1e-5), (loss, ref)

    # Case 2: exercise the multi-class-block / multi-column-chunk grid path.
    b2, nid2, d2 = 32, 8, 64
    preds2 = jax.random.normal(k2, (b2, d2), dtype=jnp.float32)
    loss2 = jax.block_until_ready(
        smooth_ap_loss(preds2, anneal=anneal, num_id=nid2,
                       block_classes=2, chunk_cols=16))
    ref2 = smooth_ap_reference(preds2, anneal, nid2)
    assert jnp.allclose(loss2, ref2, rtol=1e-5, atol=5e-5), (loss2, ref2)

    print("KERNEL_OK")
</pallas_src>

<mosaic_0001>
module attributes {stable_mosaic.version = 11 : i64} {
  func.func @_smooth_ap_kernel(%arg0: i32, %arg1: i32, %arg2: memref<8x32xf32, #tpu.memory_space<vmem>>, %arg3: memref<8x32xf32, #tpu.memory_space<vmem>>, %arg4: memref<1x1xf32, #tpu.memory_space<vmem>>, %arg5: memref<8x4xf32, #tpu.memory_space<vmem>>, %arg6: memref<8x4xf32, #tpu.memory_space<vmem>>) attributes {dimension_semantics = [#tpu.dimension_semantics<parallel>, #tpu.dimension_semantics<arbitrary>], iteration_bounds = array<i64: 1, 1>, scalar_prefetch = 0 : i64, scratch_operands = 2 : i64, tpu.core_type = #tpu.core_type<tc>, window_params = [{transform_indices = @transform_0, window_bounds = array<i64: 8, 32>}, {transform_indices = @transform_1, window_bounds = array<i64: 8, 32>}, {transform_indices = @transform_2, window_bounds = array<i64: 1, 1>}]} {
    %c0 = arith.constant 0 : index
    %c0_0 = arith.constant 0 : index
    %0 = vector.load %arg2[%c0, %c0_0] : memref<8x32xf32, #tpu.memory_space<vmem>>, vector<8x32xf32>
    %c0_i32 = arith.constant 0 : i32
    %1 = arith.cmpi eq, %arg1, %c0_i32 : i32
    %2 = arith.extui %1 : i1 to i32
    %cst = arith.constant 5.000000e+01 : f32
    %c0_i32_1 = arith.constant 0 : i32
    %3 = arith.cmpi ne, %2, %c0_i32_1 : i32
    scf.if %3 {
      %cst_18 = arith.constant dense<0.000000e+00> : vector<8x8xf32>
      %40 = tpu.matmul %0, %0, %cst_18 {dimension_numbers = #tpu.dot_dimension_numbers<[1], [1], [0], [0], [0, 0, 1, 0], [], []>} : vector<8x32xf32>, vector<8x32xf32>, vector<8x8xf32> -> vector<8x8xf32>
      %41 = vector.broadcast %cst : f32 to vector<8x8xf32>
      %42 = arith.mulf %40, %41 : vector<8x8xf32>
      %43 = vector.extract_strided_slice %42 {offsets = [0, 0], sizes = [4, 4], strides = [1, 1]} : vector<8x8xf32> to vector<4x4xf32>
      %c0_19 = arith.constant 0 : index
      %c0_20 = arith.constant 0 : index
      %44 = vector.load %arg5[%c0_19, %c0_20] : memref<8x4xf32, #tpu.memory_space<vmem>>, vector<4x4xf32>
      tpu.vector_store %arg5[%c0_19, %c0_20], %43 {strides = array<i32>} : memref<8x4xf32, #tpu.memory_space<vmem>>, vector<4x4xf32>,
      %45 = vector.extract_strided_slice %42 {offsets = [4, 4], sizes = [4, 4], strides = [1, 1]} : vector<8x8xf32> to vector<4x4xf32>
      %c4 = arith.constant 4 : index
      %c0_21 = arith.constant 0 : index
      %46 = vector.load %arg5[%c4, %c0_21] : memref<8x4xf32, #tpu.memory_space<vmem>>, vector<4x4xf32>
      tpu.vector_store %arg5[%c4, %c0_21], %45 {strides = array<i32>} : memref<8x4xf32, #tpu.memory_space<vmem>>, vector<4x4xf32>,
      %cst_22 = arith.constant 0.000000e+00 : f32
      %47 = vector.broadcast %cst_22 : f32 to vector<8x4xf32>
      %c0_23 = arith.constant 0 : index
      %c0_24 = arith.constant 0 : index
      %48 = vector.load %arg6[%c0_23, %c0_24] : memref<8x4xf32, #tpu.memory_space<vmem>>, vector<8x4xf32>
      tpu.vector_store %arg6[%c0_23, %c0_24], %47 {strides = array<i32>} : memref<8x4xf32, #tpu.memory_space<vmem>>, vector<8x4xf32>,
    } else {
    }
    %c0_2 = arith.constant 0 : index
    %c0_3 = arith.constant 0 : index
    %4 = vector.load %arg3[%c0_2, %c0_3] : memref<8x32xf32, #tpu.memory_space<vmem>>, vector<8x32xf32>
    %cst_4 = arith.constant dense<0.000000e+00> : vector<8x8xf32>
    %5 = tpu.matmul %0, %4, %cst_4 {dimension_numbers = #tpu.dot_dimension_numbers<[1], [1], [0], [0], [0, 0, 1, 0], [], []>} : vector<8x32xf32>, vector<8x32xf32>, vector<8x8xf32> -> vector<8x8xf32>
    %cst_5 = arith.constant 5.000000e+01 : f32
    %6 = vector.broadcast %cst_5 : f32 to vector<8x8xf32>
    %7 = arith.mulf %5, %6 : vector<8x8xf32>
    %c0_6 = arith.constant 0 : index
    %c0_7 = arith.constant 0 : index
    %8 = vector.load %arg5[%c0_6, %c0_7] : memref<8x4xf32, #tpu.memory_space<vmem>>, vector<8x4xf32>
    %9 = vector.extract_strided_slice %8 {offsets = [0, 0], sizes = [8, 1], strides = [1, 1]} : vector<8x4xf32> to vector<8x1xf32>
    %10 = vector.broadcast %9 : vector<8x1xf32> to vector<8x8xf32>
    %11 = arith.subf %7, %10 : vector<8x8xf32>
    %12 = math.tanh %11 : vector<8x8xf32>
    %cst_8 = arith.constant dense<0.000000e+00> : vector<8xf32>
    %13 = vector.multi_reduction <add>, %12, %cst_8 [1] : vector<8x8xf32> to vector<8xf32>
    %14 = vector.shape_cast %13 : vector<8xf32> to vector<8x1xf32>
    %15 = vector.extract_strided_slice %8 {offsets = [0, 1], sizes = [8, 1], strides = [1, 1]} : vector<8x4xf32> to vector<8x1xf32>
    %16 = vector.broadcast %15 : vector<8x1xf32> to vector<8x8xf32>
    %17 = arith.subf %7, %16 : vector<8x8xf32>
    %18 = math.tanh %17 : vector<8x8xf32>
    %cst_9 = arith.constant dense<0.000000e+00> : vector<8xf32>
    %19 = vector.multi_reduction <add>, %18, %cst_9 [1] : vector<8x8xf32> to vector<8xf32>
    %20 = vector.shape_cast %19 : vector<8xf32> to vector<8x1xf32>
    %21 = vector.extract_strided_slice %8 {offsets = [0, 2], sizes = [8, 1], strides = [1, 1]} : vector<8x4xf32> to vector<8x1xf32>
    %22 = vector.broadcast %21 : vector<8x1xf32> to vector<8x8xf32>
    %23 = arith.subf %7, %22 : vector<8x8xf32>
    %24 = math.tanh %23 : vector<8x8xf32>
    %cst_10 = arith.constant dense<0.000000e+00> : vector<8xf32>
    %25 = vector.multi_reduction <add>, %24, %cst_10 [1] : vector<8x8xf32> to vector<8xf32>
    %26 = vector.shape_cast %25 : vector<8xf32> to vector<8x1xf32>
    %27 = vector.extract_strided_slice %8 {offsets = [0, 3], sizes = [8, 1], strides = [1, 1]} : vector<8x4xf32> to vector<8x1xf32>
    %28 = vector.broadcast %27 : vector<8x1xf32> to vector<8x8xf32>
    %29 = arith.subf %7, %28 : vector<8x8xf32>
    %30 = math.tanh %29 : vector<8x8xf32>
    %cst_11 = arith.constant dense<0.000000e+00> : vector<8xf32>
    %31 = vector.multi_reduction <add>, %30, %cst_11 [1] : vector<8x8xf32> to vector<8xf32>
    %32 = vector.shape_cast %31 : vector<8xf32> to vector<8x1xf32>
    %c0_12 = arith.constant 0 : index
    %c0_13 = arith.constant 0 : index
    %33 = vector.load %arg6[%c0_12, %c0_13] : memref<8x4xf32, #tpu.memory_space<vmem>>, vector<8x4xf32>
    %34 = tpu.concatenate %14, %20, %26, %32 in 1 : vector<8x1xf32>, vector<8x1xf32>, vector<8x1xf32>, vector<8x1xf32> -> vector<8x4xf32>
    %35 = arith.addf %33, %34 : vector<8x4xf32>
    %c0_14 = arith.constant 0 : index
    %c0_15 = arith.constant 0 : index
    %36 = vector.load %arg6[%c0_14, %c0_15] : memref<8x4xf32, #tpu.memory_space<vmem>>, vector<8x4xf32>
    tpu.vector_store %arg6[%c0_14, %c0_15], %35 {strides = array<i32>} : memref<8x4xf32, #tpu.memory_space<vmem>>, vector<8x4xf32>,
    %c0_i32_16 = arith.constant 0 : i32
    %37 = arith.cmpi eq, %arg1, %c0_i32_16 : i32
    %38 = arith.extui %37 : i1 to i32
    %c0_i32_17 = arith.constant 0 : i32
    %39 = arith.cmpi ne, %38, %c0_i32_17 : i32
    scf.if %39 {
      %c0_18 = arith.constant 0 : index
      %c0_19 = arith.constant 0 : index
      %40 = vector.load %arg6[%c0_18, %c0_19] : memref<8x4xf32, #tpu.memory_space<vmem>>, vector<8x4xf32>
      %41 = vector.extract_strided_slice %8 {offsets = [0, 0], sizes = [8, 1], strides = [1, 1]} : vector<8x4xf32> to vector<8x1xf32>
      %42 = vector.broadcast %41 : vector<8x1xf32> to vector<8x4xf32>
      %43 = arith.subf %8, %42 : vector<8x4xf32>
      %44 = math.tanh %43 : vector<8x4xf32>
      %cst_20 = arith.constant dense<0.000000e+00> : vector<8xf32>
      %45 = vector.multi_reduction <add>, %44, %cst_20 [1] : vector<8x4xf32> to vector<8xf32>
      %46 = vector.shape_cast %45 : vector<8xf32> to vector<8x1xf32>
      %47 = vector.extract_strided_slice %8 {offsets = [0, 1], sizes = [8, 1], strides = [1, 1]} : vector<8x4xf32> to vector<8x1xf32>
      %48 = vector.broadcast %47 : vector<8x1xf32> to vector<8x4xf32>
      %49 = arith.subf %8, %48 : vector<8x4xf32>
      %50 = math.tanh %49 : vector<8x4xf32>
      %cst_21 = arith.constant dense<0.000000e+00> : vector<8xf32>
      %51 = vector.multi_reduction <add>, %50, %cst_21 [1] : vector<8x4xf32> to vector<8xf32>
      %52 = vector.shape_cast %51 : vector<8xf32> to vector<8x1xf32>
      %53 = vector.extract_strided_slice %8 {offsets = [0, 2], sizes = [8, 1], strides = [1, 1]} : vector<8x4xf32> to vector<8x1xf32>
      %54 = vector.broadcast %53 : vector<8x1xf32> to vector<8x4xf32>
      %55 = arith.subf %8, %54 : vector<8x4xf32>
      %56 = math.tanh %55 : vector<8x4xf32>
      %cst_22 = arith.constant dense<0.000000e+00> : vector<8xf32>
      %57 = vector.multi_reduction <add>, %56, %cst_22 [1] : vector<8x4xf32> to vector<8xf32>
      %58 = vector.shape_cast %57 : vector<8xf32> to vector<8x1xf32>
      %59 = vector.extract_strided_slice %8 {offsets = [0, 3], sizes = [8, 1], strides = [1, 1]} : vector<8x4xf32> to vector<8x1xf32>
      %60 = vector.broadcast %59 : vector<8x1xf32> to vector<8x4xf32>
      %61 = arith.subf %8, %60 : vector<8x4xf32>
      %62 = math.tanh %61 : vector<8x4xf32>
      %cst_23 = arith.constant dense<0.000000e+00> : vector<8xf32>
      %63 = vector.multi_reduction <add>, %62, %cst_23 [1] : vector<8x4xf32> to vector<8xf32>
      %64 = vector.shape_cast %63 : vector<8xf32> to vector<8x1xf32>
      %65 = tpu.concatenate %46, %52, %58, %64 in 1 : vector<8x1xf32>, vector<8x1xf32>, vector<8x1xf32>, vector<8x1xf32> -> vector<8x4xf32>
      %cst_24 = arith.constant 5.000000e-01 : f32
      %cst_25 = arith.constant 9.000000e+00 : f32
      %66 = arith.mulf %cst_24, %cst_25 : f32
      %cst_26 = arith.constant 5.000000e-01 : f32
      %67 = vector.broadcast %cst_26 : f32 to vector<8x4xf32>
      %68 = arith.mulf %67, %40 : vector<8x4xf32>
      %69 = vector.broadcast %66 : f32 to vector<8x4xf32>
      %70 = arith.addf %69, %68 : vector<8x4xf32>
      %cst_27 = arith.constant 5.000000e-01 : f32
      %cst_28 = arith.constant 5.000000e+00 : f32
      %71 = arith.mulf %cst_27, %cst_28 : f32
      %cst_29 = arith.constant 5.000000e-01 : f32
      %72 = vector.broadcast %cst_29 : f32 to vector<8x4xf32>
      %73 = arith.mulf %72, %65 : vector<8x4xf32>
      %74 = vector.broadcast %71 : f32 to vector<8x4xf32>
      %75 = arith.addf %74, %73 : vector<8x4xf32>
      %76 = arith.divf %75, %70 : vector<8x4xf32>
      %77 = vector.shape_cast %76 : vector<8x4xf32> to vector<1x8x4xf32>
      %cst_30 = arith.constant dense<0.000000e+00> : vector<1xf32>
      %78 = vector.multi_reduction <add>, %77, %cst_30 [1, 2] : vector<1x8x4xf32> to vector<1xf32>
      %79 = vector.shape_cast %78 : vector<1xf32> to vector<1x1x1xf32>
      %80 = vector.extract %79[0, 0, 0] : f32 from vector<1x1x1xf32>
      %81 = vector.broadcast %80 : f32 to vector<1x1xf32>
      %c0_31 = arith.constant 0 : index
      %c0_32 = arith.constant 0 : index
      %82 = vector.load %arg4[%c0_31, %c0_32] : memref<1x1xf32, #tpu.memory_space<vmem>>, vector<1x1xf32>
      tpu.vector_store %arg4[%c0_31, %c0_32], %81 {strides = array<i32>} : memref<1x1xf32, #tpu.memory_space<vmem>>, vector<1x1xf32>,
    } else {
    }
    return
  }
  func.func @transform_0(%arg0: i32, %arg1: i32) -> (i32, i32) {
    %c0_i32 = arith.constant 0 : i32
    %c0_i32_0 = arith.constant 0 : i32
    return %arg0, %c0_i32 : i32, i32
  }
  func.func @transform_1(%arg0: i32, %arg1: i32) -> (i32, i32) {
    %c0_i32 = arith.constant 0 : i32
    %c0_i32_0 = arith.constant 0 : i32
    return %arg1, %c0_i32 : i32, i32
  }
  func.func @transform_2(%arg0: i32, %arg1: i32) -> (i32, i32) {
    %c0_i32 = arith.constant 0 : i32
    %c0_i32_0 = arith.constant 0 : i32
    return %arg0, %c0_i32 : i32, i32
  }
}

</mosaic_0001>

<llo_original>
// kernel: tpu_custom_call.1
$region0: #{tpu_custom_call.1}
  #allocation0 [shape = 'u32[]', space=smem, size = 0x4, offset = 0x4, fixed_abs, tag = 'smem constant byte address 0x4 - core index']
  #allocation1 [shape = 'u32[144,128]{1,0:T(1,128)}', space=vmem, size = 0x12000, scoped, tag = 'internal scratch']
  #allocation2 [shape = 'f32[8,4]{1,0:T(8,128)}', space=vmem, size = 0x1000, scoped, tag = 'scratch operand']
  #allocation3 [shape = 'f32[8,4]{1,0:T(8,128)}', space=vmem, size = 0x1000, scoped, tag = 'scratch operand']
  %s0 = inlined_call_operand.hbm [shape: f32[8,32], index: 0, kind: input, shape index: {}]
  %s1 = inlined_call_operand.hbm [shape: f32[8,32], index: 1, kind: input, shape index: {}]
  %s2 = inlined_call_operand.hbm [shape: f32[1,1], index: 2, kind: output, shape index: {}]
  %s3 = sld [smem:[#allocation0]]
  $region34: #{tpu_custom_call.1} parent=0
    _
  %s5 = ssub.s32 1, %s3
  %s6 = scalar_select 0, %s5, %s3
  $region1: #{tpu_custom_call.1} parent=0
    #allocation4 [shape = 'u8[4096]{0}', space=vmem, size = 0x1000, scoped, tag = 'input window, operand 0, single buffered']
    #allocation5 [shape = 's32[1]{0}', space=sflag, size = 0x4, scoped, tag = 'scoped memory for tpu_custom_call.1']
    #allocation6 [shape = 's32[1]{0}', space=sflag, size = 0x4, scoped, tag = 'scoped memory for tpu_custom_call.1']
    #allocation7 [shape = 'u8[4096]{0}', space=vmem, size = 0x1000, scoped, tag = 'input window, operand 1, single buffered']
    #allocation8 [shape = 's32[1]{0}', space=sflag, size = 0x4, scoped, tag = 'scoped memory for tpu_custom_call.1']
    #allocation9 [shape = 'u8[512]{0}', space=vmem, size = 0x400, scoped, tag = 'output window, operand 0, single buffered']
    %7 = vsyncpa [#allocation5], 0
    %8 = vsyncpa [#allocation8], 0
    %9 = vsyncpa [#allocation6], 0
    // Predicated region
    $region2: #{tpu_custom_call.1} parent=1 // pred_check
      _
    $region3: #{tpu_custom_call.1} parent=1 // pred_check_branch
      %11 = sbr.rel (0) target = $region5
    $region4: #{tpu_custom_call.1} parent=1 // pred_region
      %s13 = ssub.s32 128, 128
      %14 = vsyncadd [#allocation5], %s13
      %s16 = sshll.u32 [#allocation4], 4
      %s17 = int_to_ptr.vmem [resolvable:$true] %s16
      %19 = dma.hbm_to_vmem [thread:$0]  %s0, 128, %s17, [#allocation5]
    $region5: #{tpu_custom_call.1} parent=1 // pred_fallthru
      _
    // Predicated region
    $region6: #{tpu_custom_call.1} parent=1 // pred_check
      _
    $region7: #{tpu_custom_call.1} parent=1 // pred_check_branch
      %21 = sbr.rel (0) target = $region9
    $region8: #{tpu_custom_call.1} parent=1 // pred_region
      %s23 = ssub.s32 128, 128
      %24 = vsyncadd [#allocation8], %s23
      %s26 = sshll.u32 [#allocation7], 4
      %s27 = int_to_ptr.vmem [resolvable:$true] %s26
      %29 = dma.hbm_to_vmem [thread:$0]  %s1, 128, %s27, [#allocation8]
    $region9: #{tpu_custom_call.1} parent=1 // pred_fallthru
      _
    // Predicated region
    $region10: #{tpu_custom_call.1} parent=1 // pred_check
      _
    $region11: #{tpu_custom_call.1} parent=1 // pred_check_branch
      %31 = sbr.rel (0) target = $region13
    $region12: #{tpu_custom_call.1} parent=1 // pred_region
      %32 = dma.done [#allocation5], 128
    $region13: #{tpu_custom_call.1} parent=1 // pred_fallthru
      _
    // Predicated region
    $region14: #{tpu_custom_call.1} parent=1 // pred_check
      _
    $region15: #{tpu_custom_call.1} parent=1 // pred_check_branch
      %34 = sbr.rel (0) target = $region17
    $region16: #{tpu_custom_call.1} parent=1 // pred_region
      %35 = dma.done [#allocation8], 128
    $region17: #{tpu_custom_call.1} parent=1 // pred_fallthru
      _
    %v36 = vld [vmem:[#allocation4] sm:$0xff]
    %p37 = scmp.eq.s32.totalorder 0, 0
    // Predicated region
    $region18: #{tpu_custom_call.1} parent=1 // pred_check
      %p38 = pneg %p37
    $region19: #{tpu_custom_call.1} parent=1 // pred_check_branch
      %40 = sbr.rel (%p38) target = $region21
    $region20: #{tpu_custom_call.1} parent=1 // pred_region
      %vm41 = vcmask 261120
      %v43 = vsel %vm41, %v36, 0
      %45 = vmatprep.subr.mxu0 0.0
      %46 = vmatpush1.xpose.msra.mxu0 %v43
      %47 = vmatprep.subr.mxu0 0.0
      %48 = vmatpush1.xpose.msra.mxu0 0.0
      %49 = vmatprep.subr.mxu0 0.0
      %50 = vmatpush1.xpose.msra.mxu0 0.0
      %51 = vmatprep.subr.mxu0 0.0
      %52 = vmatpush1.xpose.msra.mxu0 0.0
      %53 = vmatprep.subr.mxu0 0.0
      %54 = vmatpush1.xpose.msra.mxu0 0.0
      %55 = vmatprep.subr.mxu0 0.0
      %56 = vmatpush1.xpose.msra.mxu0 0.0
      %57 = vmatprep.subr.mxu0 0.0
      %58 = vmatpush1.xpose.msra.mxu0 0.0
      %59 = vmatprep.subr.mxu0 0.0
      %60 = vmatpush1.xpose.msra.mxu0 0.0
      %61 = vmatprep.subr.mxu0 0.0
      %62 = vmatpush1.xpose.msra.mxu0 0.0
      %63 = vmatprep.subr.mxu0 0.0
      %64 = vmatpush1.xpose.msra.mxu0 0.0
      %65 = vmatprep.subr.mxu0 0.0
      %66 = vmatpush1.xpose.msra.mxu0 0.0
      %67 = vmatprep.subr.mxu0 0.0
      %68 = vmatpush1.xpose.msra.mxu0 0.0
      %69 = vmatprep.subr.mxu0 0.0
      %70 = vmatpush1.xpose.msra.mxu0 0.0
      %71 = vmatprep.subr.mxu0 0.0
      %72 = vmatpush1.xpose.msra.mxu0 0.0
      %73 = vmatprep.subr.mxu0 0.0
      %74 = vmatpush1.xpose.msra.mxu0 0.0
      %75 = vmatprep.subr.mxu0 0.0
      %76 = vmatpush1.xpose.msra.mxu0 0.0
      %77 = vmatprep.subr.mxu0 0.0
      %78 = vmatpush1.xpose.msra.mxu0 0.0
      %79 = vmatprep.subr.mxu0 0.0
      %80 = vmatpush1.xpose.msra.mxu0 0.0
      %81 = vmatprep.subr.mxu0 0.0
      %82 = vmatpush1.xpose.msra.mxu0 0.0
      %83 = vmatprep.subr.mxu0 0.0
      %84 = vmatpush1.xpose.msra.mxu0 0.0
      %85 = vmatprep.subr.mxu0 0.0
      %86 = vmatpush1.xpose.msra.mxu0 0.0
      %87 = vmatprep.subr.mxu0 0.0
      %88 = vmatpush1.xpose.msra.mxu0 0.0
      %89 = vmatprep.subr.mxu0 0.0
      %90 = vmatpush1.xpose.msra.mxu0 0.0
      %91 = vmatprep.subr.mxu0 0.0
      %92 = vmatpush1.xpose.msra.mxu0 0.0
      %93 = vmatprep.subr.mxu0 0.0
      %94 = vmatpush1.xpose.msra.mxu0 0.0
      %95 = vmatprep.subr.mxu0 0.0
      %96 = vmatpush1.xpose.msra.mxu0 0.0
      %97 = vmatprep.subr.mxu0 0.0
      %98 = vmatpush1.xpose.msra.mxu0 0.0
      %99 = vmatprep.subr.mxu0 0.0
      %100 = vmatpush1.xpose.msra.mxu0 0.0
      %101 = vmatprep.subr.mxu0 0.0
      %102 = vmatpush1.xpose.msra.mxu0 0.0
      %103 = vmatprep.subr.mxu0 0.0
      %104 = vmatpush1.xpose.msra.mxu0 0.0
      %105 = vmatprep.subr.mxu0 0.0
      %106 = vmatpush1.xpose.msra.mxu0 0.0
      %107 = vmatprep.subr.mxu0 0.0
      %108 = vmatpush1.xpose.msra.mxu0 0.0
      %109 = vmatprep.mubr.f32.mxu0 0.0
      %110 = vmatmul.mubr.f32.gmra.mrb[0].mxu0 %v43
      %v111 = vpop.f32.mrb[0].mxu0
      %v112 = vadd.f32 0.0, %v111
      %v113 = vpop.f32.mrb[0].mxu0
      %114 = vdwg.mxu0
      %v115 = vmul.f32 %v112, 50.0
      %vm116 = vcmask 27648
      %117 = vst.msk [vmem:[#allocation2] sm:$0xf] %vm116, %v115
      %119 = vrot.lane.b32.xlu0 %v115, 124
      %v120 = vpop.permute.xlu0 %119
      %vm122 = vcmask 31748
      %123 = vst.msk [vmem:[#allocation2] sm:$0xf0] %vm122, %v120
      %vm124 = vcmask 31744
      %125 = vst.msk [vmem:[#allocation3] sm:$0xff] %vm124, 0.0
    $region21: #{tpu_custom_call.1} parent=1 // pred_fallthru
      _
    %v126 = vld [vmem:[#allocation7] sm:$0xff]
    %vm127 = vcmask 261120
    %v129 = vsel %vm127, %v36, 0
    %v132 = vsel %vm127, %v126, 0
    %134 = vmatprep.subr.mxu0 0.0
    %135 = vmatpush1.xpose.msra.mxu0 %v132
    %136 = vmatprep.subr.mxu0 0.0
    %137 = vmatpush1.xpose.msra.mxu0 0.0
    %138 = vmatprep.subr.mxu0 0.0
    %139 = vmatpush1.xpose.msra.mxu0 0.0
    %140 = vmatprep.subr.mxu0 0.0
    %141 = vmatpush1.xpose.msra.mxu0 0.0
    %142 = vmatprep.subr.mxu0 0.0
    %143 = vmatpush1.xpose.msra.mxu0 0.0
    %144 = vmatprep.subr.mxu0 0.0
    %145 = vmatpush1.xpose.msra.mxu0 0.0
    %146 = vmatprep.subr.mxu0 0.0
    %147 = vmatpush1.xpose.msra.mxu0 0.0
    %148 = vmatprep.subr.mxu0 0.0
    %149 = vmatpush1.xpose.msra.mxu0 0.0
    %150 = vmatprep.subr.mxu0 0.0
    %151 = vmatpush1.xpose.msra.mxu0 0.0
    %152 = vmatprep.subr.mxu0 0.0
    %153 = vmatpush1.xpose.msra.mxu0 0.0
    %154 = vmatprep.subr.mxu0 0.0
    %155 = vmatpush1.xpose.msra.mxu0 0.0
    %156 = vmatprep.subr.mxu0 0.0
    %157 = vmatpush1.xpose.msra.mxu0 0.0
    %158 = vmatprep.subr.mxu0 0.0
    %159 = vmatpush1.xpose.msra.mxu0 0.0
    %160 = vmatprep.subr.mxu0 0.0
    %161 = vmatpush1.xpose.msra.mxu0 0.0
    %162 = vmatprep.subr.mxu0 0.0
    %163 = vmatpush1.xpose.msra.mxu0 0.0
    %164 = vmatprep.subr.mxu0 0.0
    %165 = vmatpush1.xpose.msra.mxu0 0.0
    %166 = vmatprep.subr.mxu0 0.0
    %167 = vmatpush1.xpose.msra.mxu0 0.0
    %168 = vmatprep.subr.mxu0 0.0
    %169 = vmatpush1.xpose.msra.mxu0 0.0
    %170 = vmatprep.subr.mxu0 0.0
    %171 = vmatpush1.xpose.msra.mxu0 0.0
    %172 = vmatprep.subr.mxu0 0.0
    %173 = vmatpush1.xpose.msra.mxu0 0.0
    %174 = vmatprep.subr.mxu0 0.0
    %175 = vmatpush1.xpose.msra.mxu0 0.0
    %176 = vmatprep.subr.mxu0 0.0
    %177 = vmatpush1.xpose.msra.mxu0 0.0
    %178 = vmatprep.subr.mxu0 0.0
    %179 = vmatpush1.xpose.msra.mxu0 0.0
    %180 = vmatprep.subr.mxu0 0.0
    %181 = vmatpush1.xpose.msra.mxu0 0.0
    %182 = vmatprep.subr.mxu0 0.0
    %183 = vmatpush1.xpose.msra.mxu0 0.0
    %184 = vmatprep.subr.mxu0 0.0
    %185 = vmatpush1.xpose.msra.mxu0 0.0
    %186 = vmatprep.subr.mxu0 0.0
    %187 = vmatpush1.xpose.msra.mxu0 0.0
    %188 = vmatprep.subr.mxu0 0.0
    %189 = vmatpush1.xpose.msra.mxu0 0.0
    %190 = vmatprep.subr.mxu0 0.0
    %191 = vmatpush1.xpose.msra.mxu0 0.0
    %192 = vmatprep.subr.mxu0 0.0
    %193 = vmatpush1.xpose.msra.mxu0 0.0
    %194 = vmatprep.subr.mxu0 0.0
    %195 = vmatpush1.xpose.msra.mxu0 0.0
    %196 = vmatprep.subr.mxu0 0.0
    %197 = vmatpush1.xpose.msra.mxu0 0.0
    %198 = vmatprep.mubr.f32.mxu0 0.0
    %199 = vmatmul.mubr.f32.gmra.mrb[0].mxu0 %v129
    %v200 = vpop.f32.mrb[0].mxu0
    %v201 = vadd.f32 0.0, %v200
    %v202 = vpop.f32.mrb[0].mxu0
    %203 = vdwg.mxu0
    %v204 = vmul.f32 %v201, 50.0
    %v205 = vld [vmem:[#allocation2] sm:$0xff]
    %207 = vset.pattern.permute.xlu0 0
    %208 = vperm.xlu0 %207, %v205
    %v209 = vpop.permute.xlu0 %208
    %v211 = vsub.f32 %v204, %v209
    %v212 = vtanh.pop %v211
    %vm213 = vcmask 64512
    %v214 = vsel %vm213, %v212, 0.0
    %215 = vadd.xlane.f32.xlu0 %v214
    %v216 = vpop.xlane.xlu0 %215
    %217 = vset.pattern.permute.xlu0 1
    %218 = vperm.xlu0 %217, %v205
    %v219 = vpop.permute.xlu0 %218
    %v221 = vsub.f32 %v204, %v219
    %v222 = vtanh.pop %v221
    %v223 = vsel %vm213, %v222, 0.0
    %224 = vadd.xlane.f32.xlu0 %v223
    %v225 = vpop.xlane.xlu0 %224
    %226 = vset.pattern.permute.xlu0 2
    %227 = vperm.xlu0 %226, %v205
    %v228 = vpop.permute.xlu0 %227
    %v230 = vsub.f32 %v204, %v228
    %v231 = vtanh.pop %v230
    %v232 = vsel %vm213, %v231, 0.0
    %233 = vadd.xlane.f32.xlu0 %v232
    %v234 = vpop.xlane.xlu0 %233
    %235 = vset.pattern.permute.xlu0 3
    %236 = vperm.xlu0 %235, %v205
    %v237 = vpop.permute.xlu0 %236
    %v239 = vsub.f32 %v204, %v237
    %v240 = vtanh.pop %v239
    %v241 = vsel %vm213, %v240, 0.0
    %242 = vadd.xlane.f32.xlu0 %v241
    %v243 = vpop.xlane.xlu0 %242
    %v244 = vld [vmem:[#allocation3] sm:$0xff]
    %vm245 = vcmask 7168
    %v246 = vsel %vm245, %v216, %v225
    %vm247 = vcmask 15360
    %v248 = vsel %vm247, %v246, %v234
    %vm249 = vcmask 23552
    %v250 = vsel %vm249, %v248, %v243
    %v251 = vadd.f32 %v244, %v250
    %vm252 = vcmask 31744
    %253 = vst.msk [vmem:[#allocation3] sm:$0xff] %vm252, %v251
    // Predicated region
    $region22: #{tpu_custom_call.1} parent=1 // pred_check
      %p254 = pneg %p37
    $region23: #{tpu_custom_call.1} parent=1 // pred_check_branch
      %256 = sbr.rel (%p254) target = $region25
    $region24: #{tpu_custom_call.1} parent=1 // pred_region
      %v257 = vld [vmem:[#allocation3] sm:$0xff]
      %v258 = vsub.f32 %v205, %v209
      %v259 = vtanh.pop %v258
      %v260 = vsel %vm252, %v259, 0.0
      %261 = vadd.xlane.f32.xlu0 %v260
      %v262 = vpop.xlane.xlu0 %261
      %v263 = vsub.f32 %v205, %v219
      %v264 = vtanh.pop %v263
      %v265 = vsel %vm252, %v264, 0.0
      %266 = vadd.xlane.f32.xlu0 %v265
      %v267 = vpop.xlane.xlu0 %266
      %v268 = vsub.f32 %v205, %v228
      %v269 = vtanh.pop %v268
      %v270 = vsel %vm252, %v269, 0.0
      %271 = vadd.xlane.f32.xlu0 %v270
      %v272 = vpop.xlane.xlu0 %271
      %v273 = vsub.f32 %v205, %v237
      %v274 = vtanh.pop %v273
      %v275 = vsel %vm252, %v274, 0.0
      %276 = vadd.xlane.f32.xlu0 %v275
      %v277 = vpop.xlane.xlu0 %276
      %v278 = vsel %vm245, %v262, %v267
      %v279 = vsel %vm247, %v278, %v272
      %v280 = vsel %vm249, %v279, %v277
      %v281 = vmul.f32 %v257, 0.5
      %v282 = vadd.f32 %v281, 4.5
      %v283 = vmul.f32 %v280, 0.5
      %v284 = vadd.f32 %v283, 2.5
      %v285 = vrcp.pop %v282
      %v286 = vmul.f32 %v284, %v285
      %v287 = vsel %vm252, %v286, 0.0
      %288 = vadd.xlane.f32.xlu0 %v287
      %v289 = vpop.xlane.xlu0 %288
      %v290 = vrot.slane %v289, 4
      %v291 = vadd.f32 %v289, %v290
      %v292 = vrot.slane %v291, 2
      %v293 = vadd.f32 %v291, %v292
      %v294 = vrot.slane %v293, 1
      %v295 = vadd.f32 %v293, %v294
      %s296 = vtos %v295
      %v297 = vstv %s296
      %vm298 = vcmask 0
      %299 = vst.msk [vmem:[#allocation9] sm:$0x1] %vm298, %v297
    $region25: #{tpu_custom_call.1} parent=1 // pred_fallthru
      _
    // Predicated region
    $region26: #{tpu_custom_call.1} parent=1 // pred_check
      _
    $region27: #{tpu_custom_call.1} parent=1 // pred_check_branch
      %301 = sbr.rel (0) target = $region29
    $region28: #{tpu_custom_call.1} parent=1 // pred_region
      %s303 = ssub.s32 16, 16
      %304 = vsyncadd [#allocation6], %s303
      %s306 = sshll.u32 [#allocation9], 4
      %s307 = int_to_ptr.vmem [resolvable:$true] %s306
      %309 = dma.vmem_to_hbm [thread:$0]  %s307, 16, %s2, [#allocation6]
    $region29: #{tpu_custom_call.1} parent=1 // pred_fallthru
      _
    // Predicated region
    $region30: #{tpu_custom_call.1} parent=1 // pred_check
      _
    $region31: #{tpu_custom_call.1} parent=1 // pred_check_branch
      %311 = sbr.rel (0) target = $region33
    $region32: #{tpu_custom_call.1} parent=1 // pred_region
      %312 = dma.done [#allocation6], 16
    $region33: #{tpu_custom_call.1} parent=1 // pred_fallthru
      _
    %313 = vsyncpa [#allocation5], 1
    %314 = vsyncpa [#allocation8], 1
    %315 = vsyncpa [#allocation6], 1

</llo_original>
